<compile_context>
chip_gen: v7x
topology: tpu7x:2x2x1
jax: 0.10.0
libtpu: 0.0.40
codegen_flags: <defaults>
</compile_context>

<pallas_src>
import functools
import math

import jax
import jax.numpy as jnp
from jax.experimental import pallas as pl
from jax.experimental.pallas import tpu as pltpu


def _patch_merge_kernel(x_ref, we_ref, wo_ref, b_ref, o_ref, *, eps, inv_c4):
    """Fused 2x2 gather + LayerNorm(4C) + Linear(4C -> 2C, no bias) on one tile.

    x_ref : (TR, 2, W2, 2C)  row-pair tile; axis 1 = image-row parity,
                             channels = [col-even C | col-odd C]
    we_ref: (2C, 2C)         gamma-folded weight rows matching the even-row channels
    wo_ref: (2C, 2C)         gamma-folded weight rows matching the odd-row channels
    b_ref : (1, 2C)          beta @ W^T
    o_ref : (TR*W2, 2C)      merged tokens for this tile
    """
    tr, _, w2, c2 = x_ref.shape
    rows = tr * w2

    x = x_ref[...]
    xe = x[:, 0].reshape(rows, c2).astype(jnp.float32)   # [x0 | x2]
    xo = x[:, 1].reshape(rows, c2).astype(jnp.float32)   # [x1 | x3]

    # One-pass LayerNorm statistics over the full 4C merged feature.
    s1 = jnp.sum(xe, axis=-1, keepdims=True) + jnp.sum(xo, axis=-1, keepdims=True)
    s2 = jnp.sum(xe * xe, axis=-1, keepdims=True) + jnp.sum(xo * xo, axis=-1, keepdims=True)
    mean = s1 * inv_c4
    var = jnp.maximum(s2 * inv_c4 - mean * mean, 0.0)
    inv_std = jax.lax.rsqrt(var + eps)

    we = we_ref[...]
    wo = wo_ref[...]
    xne = ((xe - mean) * inv_std).astype(we.dtype)
    xno = ((xo - mean) * inv_std).astype(wo.dtype)

    y = jnp.dot(xne, we, preferred_element_type=jnp.float32)
    y = y + jnp.dot(xno, wo, preferred_element_type=jnp.float32)
    y = y + b_ref[...].astype(jnp.float32)
    o_ref[...] = y.astype(o_ref.dtype)


def _vmem_limit_bytes():
    """Generation-aware VMEM limit: ~1/2 of physical capacity, clamped to [32, 96] MiB."""
    try:
        cap = int(pltpu.get_tpu_info().vmem_capacity_bytes)
    except Exception:
        cap = 64 << 20      # conservative fallback (treat as v7x)
    return int(max(32 << 20, min(cap // 2, 96 << 20)))


def _choose_row_pair_tile(R0, W2, C2, in_size, out_size, mm_size, vmem_limit):
    """How many (even,odd) image-row pairs each grid step processes."""
    # Sublane alignment for the (tr*W2, C2) output block / f32 intermediates.
    sub = 8 if in_size >= 4 else 32 // in_size
    align = max(1, sub // math.gcd(sub, W2))
    if R0 <= align:
        return R0                                   # single full block

    budget = int(0.6 * vmem_limit)                  # headroom for compiler scratch
    # Resident weights + bias (constant index -> fetched once, but 2 buffers allocated).
    weight_bytes = 2 * (2 * C2 * C2 * mm_size) + 2 * C2 * 4
    # Per row-pair bytes:
    #   input block  (2, W2, C2), double-buffered          -> 4 * in_size
    #   output block (W2, C2),    double-buffered          -> 2 * out_size
    #   in-kernel temporaries xe,xo (f32), xne,xno (mm), y (f32) -> 8 + 2*mm_size + 4
    per_pair = W2 * C2 * (4 * in_size + 2 * out_size + (8 + 2 * mm_size + 4))
    by_vmem = max(1, (budget - weight_bytes) // per_pair)
    by_rows = max(1, 8192 // W2)                    # ~8K merged rows/step is past the knee
    tr = int(max(1, min(R0, by_vmem, by_rows)))
    # Keep >= ~8 grid steps when R0 allows: each v7x TensorCore gets several steps,
    # so prologue/epilogue DMAs overlap with compute (also helps v5e/v6e pipelining).
    tr = max(1, min(tr, max(1, R0 // 8)))
    # Round so tr*W2 is a multiple of the sublane count (full-sublane intermediates).
    tr = max(align, tr - tr % align)
    # Prefer a nearby tile that divides R0 (no ragged last block) and keeps alignment.
    for cand in range(tr, max(tr // 2, align) - 1, -1):
        if R0 % cand == 0 and (cand * W2) % sub == 0:
            return cand
    return tr


def patch_merging_forward(x, S, H, W, params, down_sample_size=(1, 2, 2), eps=1e-5,
                          matmul_dtype=None):
    """Equivalent of PatchMerging.forward for down_sample_size=(1,2,2).

    x: (B, S*H*W, C) -> (B, S*ceil(H/2)*ceil(W/2), 2*C)
    params: 'norm_weight' (4C,), 'norm_bias' (4C,), 'reduction_weight' (2C, 4C).
    """
    assert down_sample_size == (1, 2, 2)
    B, L, C = x.shape
    assert L == S * H * W, "input feature has wrong size"

    x = x.reshape(B, S, H, W, C)
    if (H % 2) or (W % 2):
        x = jnp.pad(x, ((0, 0), (0, 0), (0, H % 2), (0, W % 2), (0, 0)))
    Hp, Wp = H + H % 2, W + W % 2
    H2, W2 = Hp // 2, Wp // 2
    R0 = B * S * H2            # number of (even,odd) image-row pairs
    C2 = 2 * C

    # Free reshape (no data movement): (B,S,Hp,Wp,C) -> (R0, 2, W2, 2C);
    # axis 1 = row parity, last dim = [col-even C channels | col-odd C channels].
    x4 = x.reshape(R0, 2, W2, C2)

    # Fold LayerNorm affine into the reduction weight (once, outside the kernel):
    #   y = ((x-mu)/sd * gamma + beta) @ W^T = ((x-mu)/sd) @ (gamma[:,None]*W^T) + beta@W^T
    w_t = params["reduction_weight"].T.astype(jnp.float32)          # (4C, 2C)
    gamma = params["norm_weight"].astype(jnp.float32)
    beta = params["norm_bias"].astype(jnp.float32)
    w_fold = gamma[:, None] * w_t                                    # (4C, 2C)
    b_fold = (beta @ w_t).reshape(1, C2)                             # (1, 2C)
    # Re-group rows to the fused even/odd channel order:
    #   even stream = [x0 | x2] -> rows [0:C], [2C:3C]
    #   odd  stream = [x1 | x3] -> rows [C:2C], [3C:4C]
    we = jnp.concatenate([w_fold[0:C], w_fold[2 * C:3 * C]], axis=0)      # (2C, 2C)
    wo = jnp.concatenate([w_fold[C:2 * C], w_fold[3 * C:4 * C]], axis=0)  # (2C, 2C)

    if matmul_dtype is None:
        # bf16 operands (f32 accumulation) when the activations are bf16; else f32.
        matmul_dtype = jnp.bfloat16 if x.dtype == jnp.bfloat16 else jnp.float32
    we = we.astype(matmul_dtype)
    wo = wo.astype(matmul_dtype)

    in_size = jnp.dtype(x.dtype).itemsize
    out_size = in_size
    mm_size = jnp.dtype(matmul_dtype).itemsize
    vmem_limit = _vmem_limit_bytes()
    tr = _choose_row_pair_tile(R0, W2, C2, in_size, out_size, mm_size, vmem_limit)

    kernel = functools.partial(_patch_merge_kernel, eps=eps, inv_c4=1.0 / (4.0 * C))
    R_out = R0 * W2            # total merged tokens
    out = pl.pallas_call(
        kernel,
        out_shape=jax.ShapeDtypeStruct((R_out, C2), x.dtype),
        grid=(pl.cdiv(R0, tr),),                  # ragged last block: no pad/slice needed
        in_specs=[
            pl.BlockSpec((tr, 2, W2, C2), lambda i: (i, 0, 0, 0)),   # one contiguous stream
            pl.BlockSpec((C2, C2), lambda i: (0, 0)),                # We (resident)
            pl.BlockSpec((C2, C2), lambda i: (0, 0)),                # Wo (resident)
            pl.BlockSpec((1, C2), lambda i: (0, 0)),                 # b'
        ],
        out_specs=pl.BlockSpec((tr * W2, C2), lambda i: (i, 0)),
        compiler_params=pltpu.CompilerParams(
            dimension_semantics=("parallel",),
            vmem_limit_bytes=vmem_limit,
        ),
    )(x4, we, wo, b_fold)

    return out.reshape(B, S * H2 * W2, C2)


def _reference_forward(x, S, H, W, params, eps=1e-5):
    """Pure-JAX reference (mirrors the PyTorch module)."""
    B, L, C = x.shape
    x = x.reshape(B, S, H, W, C)
    if (H % 2) or (W % 2):
        x = jnp.pad(x, ((0, 0), (0, 0), (0, H % 2), (0, W % 2), (0, 0)))
    x0 = x[:, :, 0::2, 0::2, :]
    x1 = x[:, :, 1::2, 0::2, :]
    x2 = x[:, :, 0::2, 1::2, :]
    x3 = x[:, :, 1::2, 1::2, :]
    xm = jnp.concatenate([x0, x1, x2, x3], axis=-1).reshape(B, -1, 4 * C)
    mean = jnp.mean(xm, axis=-1, keepdims=True)
    var = jnp.mean((xm - mean) ** 2, axis=-1, keepdims=True)
    xn = (xm - mean) / jnp.sqrt(var + eps)
    xn = xn * params["norm_weight"] + params["norm_bias"]
    return jnp.einsum("blc,dc->bld", xn, params["reduction_weight"],
                      precision=jax.lax.Precision.HIGHEST)


if __name__ == "__main__":
    # Small shapes consistent with the module: dim=C=32, S=2, H=W=8, B=2.
    B, S, H, W, C = 2, 2, 8, 8, 32

    key = jax.random.PRNGKey(0)
    kx, kw, kg, kb = jax.random.split(key, 4)

    x = jax.random.normal(kx, (B, S * H * W, C), dtype=jnp.float32)
    params = {
        # nn.Linear(4*dim, 2*dim, bias=False) -> weight (2*dim, 4*dim)
        "reduction_weight": jax.random.normal(kw, (2 * C, 4 * C), jnp.float32) * 0.05,
        # nn.LayerNorm(4*dim)
        "norm_weight": 1.0 + 0.1 * jax.random.normal(kg, (4 * C,), jnp.float32),
        "norm_bias": 0.1 * jax.random.normal(kb, (4 * C,), jnp.float32),
    }

    out = patch_merging_forward(x, S, H, W, params)
    out = jax.block_until_ready(out)
    ref = _reference_forward(x, S, H, W, params)
    assert out.shape == (B, S * (H // 2) * (W // 2), 2 * C), out.shape
    max_err = float(jnp.max(jnp.abs(out - ref)))
    assert jnp.allclose(out, ref, atol=2e-4, rtol=2e-4), f"mismatch vs reference: {max_err}"

    # Odd H/W exercises the same padding branch as the PyTorch module.
    H2_, W2_ = 7, 7
    x_odd = jax.random.normal(kx, (B, S * H2_ * W2_, C), dtype=jnp.float32)
    out_odd = jax.block_until_ready(patch_merging_forward(x_odd, S, H2_, W2_, params))
    ref_odd = _reference_forward(x_odd, S, H2_, W2_, params)
    assert out_odd.shape == (B, S * 4 * 4, 2 * C), out_odd.shape
    assert jnp.allclose(out_odd, ref_odd, atol=2e-4, rtol=2e-4), \
        f"odd-size mismatch: {float(jnp.max(jnp.abs(out_odd - ref_odd)))}"

    print("KERNEL_OK")
</pallas_src>

<mosaic_0001>
module attributes {stable_mosaic.version = 11 : i64} {
  func.func @_patch_merge_kernel(%arg0: i32, %arg1: memref<2x2x4x64xf32, #tpu.memory_space<vmem>>, %arg2: memref<64x64xf32, #tpu.memory_space<vmem>>, %arg3: memref<64x64xf32, #tpu.memory_space<vmem>>, %arg4: memref<1x64xf32, #tpu.memory_space<vmem>>, %arg5: memref<8x64xf32, #tpu.memory_space<vmem>>) attributes {dimension_semantics = [#tpu.dimension_semantics<parallel>], iteration_bounds = array<i64: 8>, scalar_prefetch = 0 : i64, scratch_operands = 0 : i64, tpu.core_type = #tpu.core_type<tc>, window_params = [{transform_indices = @transform_0, window_bounds = array<i64: 2, 2, 4, 64>}, {pipeline_mode = #tpu.pipeline_mode<synchronous>, transform_indices = @transform_1, window_bounds = array<i64: 64, 64>}, {pipeline_mode = #tpu.pipeline_mode<synchronous>, transform_indices = @transform_2, window_bounds = array<i64: 64, 64>}, {pipeline_mode = #tpu.pipeline_mode<synchronous>, transform_indices = @transform_3, window_bounds = array<i64: 1, 64>}, {transform_indices = @transform_4, window_bounds = array<i64: 8, 64>}]} {
    %c0 = arith.constant 0 : index
    %c0_0 = arith.constant 0 : index
    %c0_1 = arith.constant 0 : index
    %c0_2 = arith.constant 0 : index
    %0 = vector.load %arg1[%c0, %c0_0, %c0_1, %c0_2] : memref<2x2x4x64xf32, #tpu.memory_space<vmem>>, vector<2x2x4x64xf32>
    %1 = vector.extract_strided_slice %0 {offsets = [0, 0, 0, 0], sizes = [2, 1, 4, 64], strides = [1, 1, 1, 1]} : vector<2x2x4x64xf32> to vector<2x1x4x64xf32>
    %2 = vector.shape_cast %1 : vector<2x1x4x64xf32> to vector<2x4x64xf32>
    %3 = vector.shape_cast %2 : vector<2x4x64xf32> to vector<8x64xf32>
    %4 = vector.extract_strided_slice %0 {offsets = [0, 1, 0, 0], sizes = [2, 1, 4, 64], strides = [1, 1, 1, 1]} : vector<2x2x4x64xf32> to vector<2x1x4x64xf32>
    %5 = vector.shape_cast %4 : vector<2x1x4x64xf32> to vector<2x4x64xf32>
    %6 = vector.shape_cast %5 : vector<2x4x64xf32> to vector<8x64xf32>
    %cst = arith.constant dense<0.000000e+00> : vector<8xf32>
    %7 = vector.multi_reduction <add>, %3, %cst [1] : vector<8x64xf32> to vector<8xf32>
    %8 = vector.shape_cast %7 : vector<8xf32> to vector<8x1xf32>
    %cst_3 = arith.constant dense<0.000000e+00> : vector<8xf32>
    %9 = vector.multi_reduction <add>, %6, %cst_3 [1] : vector<8x64xf32> to vector<8xf32>
    %10 = vector.shape_cast %9 : vector<8xf32> to vector<8x1xf32>
    %11 = arith.addf %8, %10 : vector<8x1xf32>
    %12 = arith.mulf %3, %3 : vector<8x64xf32>
    %cst_4 = arith.constant dense<0.000000e+00> : vector<8xf32>
    %13 = vector.multi_reduction <add>, %12, %cst_4 [1] : vector<8x64xf32> to vector<8xf32>
    %14 = vector.shape_cast %13 : vector<8xf32> to vector<8x1xf32>
    %15 = arith.mulf %6, %6 : vector<8x64xf32>
    %cst_5 = arith.constant dense<0.000000e+00> : vector<8xf32>
    %16 = vector.multi_reduction <add>, %15, %cst_5 [1] : vector<8x64xf32> to vector<8xf32>
    %17 = vector.shape_cast %16 : vector<8xf32> to vector<8x1xf32>
    %18 = arith.addf %14, %17 : vector<8x1xf32>
    %cst_6 = arith.constant 7.812500e-03 : f32
    %19 = vector.broadcast %cst_6 : f32 to vector<8x1xf32>
    %20 = arith.mulf %11, %19 : vector<8x1xf32>
    %cst_7 = arith.constant 7.812500e-03 : f32
    %21 = vector.broadcast %cst_7 : f32 to vector<8x1xf32>
    %22 = arith.mulf %18, %21 : vector<8x1xf32>
    %23 = arith.mulf %20, %20 : vector<8x1xf32>
    %24 = arith.subf %22, %23 : vector<8x1xf32>
    %cst_8 = arith.constant 0.000000e+00 : f32
    %25 = vector.broadcast %cst_8 : f32 to vector<8x1xf32>
    %26 = arith.maximumf %24, %25 : vector<8x1xf32>
    %cst_9 = arith.constant 9.99999974E-6 : f32
    %27 = vector.broadcast %cst_9 : f32 to vector<8x1xf32>
    %28 = arith.addf %26, %27 : vector<8x1xf32>
    %29 = math.rsqrt %28 : vector<8x1xf32>
    %c0_10 = arith.constant 0 : index
    %c0_11 = arith.constant 0 : index
    %30 = vector.load %arg2[%c0_10, %c0_11] : memref<64x64xf32, #tpu.memory_space<vmem>>, vector<64x64xf32>
    %c0_12 = arith.constant 0 : index
    %c0_13 = arith.constant 0 : index
    %31 = vector.load %arg3[%c0_12, %c0_13] : memref<64x64xf32, #tpu.memory_space<vmem>>, vector<64x64xf32>
    %32 = vector.broadcast %20 : vector<8x1xf32> to vector<8x64xf32>
    %33 = arith.subf %3, %32 : vector<8x64xf32>
    %34 = vector.broadcast %29 : vector<8x1xf32> to vector<8x64xf32>
    %35 = arith.mulf %33, %34 : vector<8x64xf32>
    %36 = vector.broadcast %20 : vector<8x1xf32> to vector<8x64xf32>
    %37 = arith.subf %6, %36 : vector<8x64xf32>
    %38 = vector.broadcast %29 : vector<8x1xf32> to vector<8x64xf32>
    %39 = arith.mulf %37, %38 : vector<8x64xf32>
    %cst_14 = arith.constant dense<0.000000e+00> : vector<8x64xf32>
    %40 = tpu.matmul %35, %30, %cst_14 {dimension_numbers = #tpu.dot_dimension_numbers<[1], [0], [0], [1], [0, 0, 1, 1], [], []>} : vector<8x64xf32>, vector<64x64xf32>, vector<8x64xf32> -> vector<8x64xf32>
    %cst_15 = arith.constant dense<0.000000e+00> : vector<8x64xf32>
    %41 = tpu.matmul %39, %31, %cst_15 {dimension_numbers = #tpu.dot_dimension_numbers<[1], [0], [0], [1], [0, 0, 1, 1], [], []>} : vector<8x64xf32>, vector<64x64xf32>, vector<8x64xf32> -> vector<8x64xf32>
    %42 = arith.addf %40, %41 : vector<8x64xf32>
    %c0_16 = arith.constant 0 : index
    %c0_17 = arith.constant 0 : index
    %43 = vector.load %arg4[%c0_16, %c0_17] : memref<1x64xf32, #tpu.memory_space<vmem>>, vector<1x64xf32>
    %44 = vector.broadcast %43 : vector<1x64xf32> to vector<8x64xf32>
    %45 = arith.addf %42, %44 : vector<8x64xf32>
    %c0_18 = arith.constant 0 : index
    %c0_19 = arith.constant 0 : index
    %46 = vector.load %arg5[%c0_18, %c0_19] : memref<8x64xf32, #tpu.memory_space<vmem>>, vector<8x64xf32>
    tpu.vector_store %arg5[%c0_18, %c0_19], %45 {strides = array<i32>} : memref<8x64xf32, #tpu.memory_space<vmem>>, vector<8x64xf32>,
    return
  }
  func.func @transform_0(%arg0: i32) -> (i32, i32, i32, i32) {
    %c0_i32 = arith.constant 0 : i32
    %c0_i32_0 = arith.constant 0 : i32
    %c0_i32_1 = arith.constant 0 : i32
    %c0_i32_2 = arith.constant 0 : i32
    return %arg0, %c0_i32, %c0_i32_0, %c0_i32_1 : i32, i32, i32, i32
  }
  func.func @transform_1(%arg0: i32) -> (i32, i32) {
    %c0_i32 = arith.constant 0 : i32
    %c0_i32_0 = arith.constant 0 : i32
    %c0_i32_1 = arith.constant 0 : i32
    return %c0_i32, %c0_i32_0 : i32, i32
  }
  func.func @transform_2(%arg0: i32) -> (i32, i32) {
    %c0_i32 = arith.constant 0 : i32
    %c0_i32_0 = arith.constant 0 : i32
    %c0_i32_1 = arith.constant 0 : i32
    return %c0_i32, %c0_i32_0 : i32, i32
  }
  func.func @transform_3(%arg0: i32) -> (i32, i32) {
    %c0_i32 = arith.constant 0 : i32
    %c0_i32_0 = arith.constant 0 : i32
    %c0_i32_1 = arith.constant 0 : i32
    return %c0_i32, %c0_i32_0 : i32, i32
  }
  func.func @transform_4(%arg0: i32) -> (i32, i32) {
    %c0_i32 = arith.constant 0 : i32
    %c0_i32_0 = arith.constant 0 : i32
    return %arg0, %c0_i32 : i32, i32
  }
}

</mosaic_0001>

<llo_original>
// kernel: tpu_custom_call.1
$region0: #{tpu_custom_call.1}
  #allocation0 [shape = 'u32[]', space=smem, size = 0x4, offset = 0x4, fixed_abs, tag = 'smem constant byte address 0x4 - core index']
  #allocation1 [shape = 'u32[144,128]{1,0:T(1,128)}', space=vmem, size = 0x12000, scoped, tag = 'internal scratch']
  %s0 = inlined_call_operand.hbm [shape: f32[16,2,4,64], index: 0, kind: input, shape index: {}]
  %s1 = inlined_call_operand.hbm [shape: f32[64,64], index: 1, kind: input, shape index: {}]
  %s2 = inlined_call_operand.hbm [shape: f32[64,64], index: 2, kind: input, shape index: {}]
  %s3 = inlined_call_operand.vmem [shape: f32[1,64], index: 3, kind: input, shape index: {}]
  %s4 = inlined_call_operand.hbm [shape: f32[64,64], index: 4, kind: output, shape index: {}]
  %s5 = sld [smem:[#allocation0]]
  $region61: #{tpu_custom_call.1} parent=0
    _
  %s7 = ssub.s32 1, %s5
  %s8 = scalar_select 0, %s7, %s5
  $region1: #{tpu_custom_call.1} parent=0
    #allocation2 [shape = 'u8[16384]{0}', space=vmem, size = 0x4000, scoped, tag = 'input window, operand 0']
    #allocation3 [shape = 's32[2]{0}', space=sflag, size = 0x8, scoped, tag = 'scoped memory for tpu_custom_call.1']
    #allocation4 [shape = 's32[2]{0}', space=sflag, size = 0x8, scoped, tag = 'scoped memory for tpu_custom_call.1']
    #allocation5 [shape = 'u8[32768]{0}', space=vmem, size = 0x8000, scoped, tag = 'input window, operand 1, single buffered']
    #allocation6 [shape = 's32[1]{0}', space=sflag, size = 0x4, scoped, tag = 'scoped memory for tpu_custom_call.1']
    #allocation7 [shape = 'u8[32768]{0}', space=vmem, size = 0x8000, scoped, tag = 'input window, operand 2, single buffered']
    #allocation8 [shape = 'u8[8192]{0}', space=vmem, size = 0x2000, scoped, tag = 'output window, operand 0']
    %9 = vsyncpa [#allocation3], 0
    %s10 = scalar_lea.sflag [#allocation3], 1
    %11 = vsyncpa %s10, 0
    %12 = vsyncpa [#allocation6], 0
    %13 = vsyncpa [#allocation4], 0
    %s14 = scalar_lea.sflag [#allocation4], 1
    %15 = vsyncpa %s14, 0
    loop: start=0, step=1, limit=10
    $region2: #{tpu_custom_call.1} parent=1 // loop_pre_header
      _
    $region3: #{tpu_custom_call.1} parent=1 // loop_header
      %s17 = sphi 0, %s21
      %p18 = scmp.ge.s32.totalorder %s17, 10
      %s27 = sphi 0, %s29
      %s30 = sphi 0, %s27
      %s31 = sphi 0, %s30
      %s47 = sphi 0, %s31
      %s51 = sphi 0, %s51
      %s53 = sphi 0, %s51
      %s54 = sphi 0, %s53
      %s68 = sphi 0, %s54
      %s72 = sphi 0, %s72
      %s74 = sphi 0, %s72
      %s75 = sphi 0, %s74
      %s89 = sphi 0, %s75
      %s93 = sphi 0, %s93
      %s95 = sphi 0, %s93
      %s96 = sphi 0, %s95
      %s110 = sphi 0, %s96
      %s116 = sphi 0, %s118
      %s119 = sphi 0, %s116
      %s120 = sphi 0, %s119
      %s136 = sphi 0, %s120
    $region4: #{tpu_custom_call.1} parent=1 // loop_header_branch
      %20 = sbr.rel (%p18) target = $region8
    $region5: #{tpu_custom_call.1} parent=1 // loop_body
      %s22 = ssub.s32 %s17, 1
      %s23 = ssub.s32 %s17, 2
      %s24 = sadd.s32 %s17, 1
      %s25 = ssub.s32 %s17, %s24
      %p26 = scmp.eq.s32.totalorder %s25, 0
      %s28 = sadd.s32 %s27, 1
      %s29 = scalar_select %p26, %s27, %s28
      %p32 = pneg %p26
      %p33 = scmp.eq.s32.totalorder %s17, 7
      %p34 = por %p32, %p33
      %p35 = scmp.ne.s32.totalorder %s27, %s30
      %p36 = scmp.eq.s32.totalorder %s17, 0
      %p37 = por %p35, %p36
      %p38 = scmp.ne.s32.totalorder %s27, %s30
      %p39 = scmp.eq.s32.totalorder %s22, 7
      %p40 = por %p38, %p39
      %p41 = scmp.ne.s32.totalorder %s30, %s31
      %p42 = scmp.eq.s32.totalorder %s22, 0
      %p43 = por %p41, %p42
      %p44 = scmp.ne.s32.totalorder %s30, %s31
      %p45 = scmp.eq.s32.totalorder %s23, 7
      %p46 = por %p44, %p45
      %p48 = scmp.ne.s32.totalorder %s31, %s47
      %p49 = scmp.eq.s32.totalorder %s23, 0
      %p50 = por %p48, %p49
      %s52 = sadd.s32 %s51, 1
      %p55 = scmp.eq.s32.totalorder %s17, 7
      %p56 = scmp.ne.s32.totalorder %s51, %s53
      %p57 = scmp.eq.s32.totalorder %s17, 0
      %p58 = por %p56, %p57
      %p59 = scmp.ne.s32.totalorder %s51, %s53
      %p60 = scmp.eq.s32.totalorder %s22, 7
      %p61 = por %p59, %p60
      %p62 = scmp.ne.s32.totalorder %s53, %s54
      %p63 = scmp.eq.s32.totalorder %s22, 0
      %p64 = por %p62, %p63
      %p65 = scmp.ne.s32.totalorder %s53, %s54
      %p66 = scmp.eq.s32.totalorder %s23, 7
      %p67 = por %p65, %p66
      %p69 = scmp.ne.s32.totalorder %s54, %s68
      %p70 = scmp.eq.s32.totalorder %s23, 0
      %p71 = por %p69, %p70
      %s73 = sadd.s32 %s72, 1
      %p76 = scmp.eq.s32.totalorder %s17, 7
      %p77 = scmp.ne.s32.totalorder %s72, %s74
      %p78 = scmp.eq.s32.totalorder %s17, 0
      %p79 = por %p77, %p78
      %p80 = scmp.ne.s32.totalorder %s72, %s74
      %p81 = scmp.eq.s32.totalorder %s22, 7
      %p82 = por %p80, %p81
      %p83 = scmp.ne.s32.totalorder %s74, %s75
      %p84 = scmp.eq.s32.totalorder %s22, 0
      %p85 = por %p83, %p84
      %p86 = scmp.ne.s32.totalorder %s74, %s75
      %p87 = scmp.eq.s32.totalorder %s23, 7
      %p88 = por %p86, %p87
      %p90 = scmp.ne.s32.totalorder %s75, %s89
      %p91 = scmp.eq.s32.totalorder %s23, 0
      %p92 = por %p90, %p91
      %s94 = sadd.s32 %s93, 1
      %p97 = scmp.eq.s32.totalorder %s17, 7
      %p98 = scmp.ne.s32.totalorder %s93, %s95
      %p99 = scmp.eq.s32.totalorder %s17, 0
      %p100 = por %p98, %p99
      %p101 = scmp.ne.s32.totalorder %s93, %s95
      %p102 = scmp.eq.s32.totalorder %s22, 7
      %p103 = por %p101, %p102
      %p104 = scmp.ne.s32.totalorder %s95, %s96
      %p105 = scmp.eq.s32.totalorder %s22, 0
      %p106 = por %p104, %p105
      %p107 = scmp.ne.s32.totalorder %s95, %s96
      %p108 = scmp.eq.s32.totalorder %s23, 7
      %p109 = por %p107, %p108
      %p111 = scmp.ne.s32.totalorder %s96, %s110
      %p112 = scmp.eq.s32.totalorder %s23, 0
      %p113 = por %p111, %p112
      %s114 = ssub.s32 %s17, %s24
      %p115 = scmp.eq.s32.totalorder %s114, 0
      %s117 = sadd.s32 %s116, 1
      %s118 = scalar_select %p115, %s116, %s117
      %p121 = pneg %p115
      %p122 = scmp.eq.s32.totalorder %s17, 7
      %p123 = por %p121, %p122
      %p124 = scmp.ne.s32.totalorder %s116, %s119
      %p125 = scmp.eq.s32.totalorder %s17, 0
      %p126 = por %p124, %p125
      %p127 = scmp.ne.s32.totalorder %s116, %s119
      %p128 = scmp.eq.s32.totalorder %s22, 7
      %p129 = por %p127, %p128
      %p130 = scmp.ne.s32.totalorder %s119, %s120
      %p131 = scmp.eq.s32.totalorder %s22, 0
      %p132 = por %p130, %p131
      %p133 = scmp.ne.s32.totalorder %s119, %s120
      %p134 = scmp.eq.s32.totalorder %s23, 7
      %p135 = por %p133, %p134
      %p137 = scmp.ne.s32.totalorder %s120, %s136
      %p138 = scmp.eq.s32.totalorder %s23, 0
      %p139 = por %p137, %p138
      %p140 = scmp.le.s32.totalorder 1, %s17
      %p141 = scmp.lt.s32.totalorder %s17, 9
      %p142 = pnand %p140, %p141
      %p143 = pneg %p142
      // Predicated region
      $region9: #{tpu_custom_call.1} parent=5 // pred_check
        _
      $region10: #{tpu_custom_call.1} parent=5 // pred_check_branch
        %145 = sbr.rel (%p142) target = $region12
      $region11: #{tpu_custom_call.1} parent=5 // pred_region
        %s146 = ssub.s32 %s17, 1
        // Predicated region
        $region13: #{tpu_custom_call.1} parent=11 // pred_check
          %p147 = pneg %p64
        $region14: #{tpu_custom_call.1} parent=11 // pred_check_branch
          %149 = sbr.rel (%p147) target = $region16
        $region15: #{tpu_custom_call.1} parent=11 // pred_region
          %s151 = ssub.s32 1024, 1024
          %152 = vsyncadd [#allocation6], %s151
          %s153 = sshll.u32 [#allocation5], 4
          %s154 = int_to_ptr.vmem [resolvable:$true] %s153
          %159 = dma.hbm_to_vmem [thread:$0]  %s1, 1024, %s154, [#allocation6], 128, 128, 8
        $region16: #{tpu_custom_call.1} parent=11 // pred_fallthru
          _
        // Predicated region
        $region17: #{tpu_custom_call.1} parent=11 // pred_check
          %p160 = pneg %p85
        $region18: #{tpu_custom_call.1} parent=11 // pred_check_branch
          %162 = sbr.rel (%p160) target = $region20
        $region19: #{tpu_custom_call.1} parent=11 // pred_region
          %s164 = ssub.s32 1024, 1024
          %165 = vsyncadd [#allocation6], %s164
          %s166 = sshll.u32 [#allocation7], 4
          %s167 = int_to_ptr.vmem [resolvable:$true] %s166
          %172 = dma.hbm_to_vmem [thread:$0]  %s2, 1024, %s167, [#allocation6], 128, 128, 8
        $region20: #{tpu_custom_call.1} parent=11 // pred_fallthru
          _
        // Predicated region
        $region21: #{tpu_custom_call.1} parent=11 // pred_check
          %p173 = pneg %p106
        $region22: #{tpu_custom_call.1} parent=11 // pred_check_branch
          %175 = sbr.rel (%p173) target = $region24
        $region23: #{tpu_custom_call.1} parent=11 // pred_region
          _
        $region24: #{tpu_custom_call.1} parent=11 // pred_fallthru
          _
      $region12: #{tpu_custom_call.1} parent=5 // pred_fallthru
        _
      %p176 = scmp.lt.s32.totalorder %s17, 8
      // Predicated region
      $region25: #{tpu_custom_call.1} parent=5 // pred_check
        %p177 = pneg %p176
      $region26: #{tpu_custom_call.1} parent=5 // pred_check_branch
        %179 = sbr.rel (%p177) target = $region28
      $region27: #{tpu_custom_call.1} parent=5 // pred_region
        // Predicated region
        $region29: #{tpu_custom_call.1} parent=27 // pred_check
          %p180 = pneg %p37
        $region30: #{tpu_custom_call.1} parent=27 // pred_check_branch
          %182 = sbr.rel (%p180) target = $region32
        $region31: #{tpu_custom_call.1} parent=27 // pred_region
          %s183 = sand.u32 %s27, 1
          %s184 = scalar_lea.sflag [#allocation3], %s183
          %s185 = sand.u32 %s27, 1
          %s186 = smul.addr %s185, 16
          %s187 = scalar_lea.vmem [#allocation2], %s186
          %s188 = smul.u32 2, %s17
          %s190 = ssub.s32 256, 256
          %191 = vsyncadd %s184, %s190
          %s192 = smul.addr %s188, 2
          %s193 = smul.addr %s192, 64
          %s194 = scalar_lea.hbm %s0, %s193
          %s195 = sshll.u32 %s187, 4
          %s196 = int_to_ptr.vmem [resolvable:$true] %s195
          %201 = dma.hbm_to_vmem [thread:$0]  %s194, 256, %s196, %s184, 64, 64, 4
        $region32: #{tpu_custom_call.1} parent=27 // pred_fallthru
          _
      $region28: #{tpu_custom_call.1} parent=5 // pred_fallthru
        _
      %p202 = scmp.le.s32.totalorder 1, %s17
      %p203 = scmp.lt.s32.totalorder %s17, 9
      %p204 = pnand %p202, %p203
      %p205 = pneg %p204
      // Predicated region
      $region33: #{tpu_custom_call.1} parent=5 // pred_check
        _
      $region34: #{tpu_custom_call.1} parent=5 // pred_check_branch
        %207 = sbr.rel (%p204) target = $region36
      $region35: #{tpu_custom_call.1} parent=5 // pred_region
        %s208 = ssub.s32 %s17, 1
        %s209 = sand.u32 %s30, 1
        %s210 = scalar_lea.sflag [#allocation3], %s209
        %s211 = sand.u32 %s30, 1
        %s212 = smul.addr %s211, 16
        %s213 = scalar_lea.vmem [#allocation2], %s212
        // Predicated region
        $region37: #{tpu_custom_call.1} parent=35 // pred_check
          %p214 = pneg %p43
        $region38: #{tpu_custom_call.1} parent=35 // pred_check_branch
          %216 = sbr.rel (%p214) target = $region40
        $region39: #{tpu_custom_call.1} parent=35 // pred_region
          %217 = dma.done %s210, 256
        $region40: #{tpu_custom_call.1} parent=35 // pred_fallthru
          _
        // Predicated region
        $region41: #{tpu_custom_call.1} parent=35 // pred_check
          %p218 = pneg %p64
        $region42: #{tpu_custom_call.1} parent=35 // pred_check_branch
          %220 = sbr.rel (%p218) target = $region44
        $region43: #{tpu_custom_call.1} parent=35 // pred_region
          %221 = dma.done [#allocation6], 1024
        $region44: #{tpu_custom_call.1} parent=35 // pred_fallthru
          _
        // Predicated region
        $region45: #{tpu_custom_call.1} parent=35 // pred_check
          %p222 = pneg %p85
        $region46: #{tpu_custom_call.1} parent=35 // pred_check_branch
          %224 = sbr.rel (%p222) target = $region48
        $region47: #{tpu_custom_call.1} parent=35 // pred_region
          %225 = dma.done [#allocation6], 1024
        $region48: #{tpu_custom_call.1} parent=35 // pred_fallthru
          _
        %s226 = sand.u32 %s30, 1
        %s227 = scalar_lea.sflag [#allocation3], %s226
        %s228 = sand.u32 %s30, 1
        %s229 = smul.addr %s228, 16
        %s230 = scalar_lea.vmem [#allocation2], %s229
        %p231 = pneg %p43
        %p232 = pneg %p40
        %p233 = pneg %p64
        %p234 = pneg %p61
        %p235 = pneg %p85
        %p236 = pneg %p82
        %p237 = pneg %p106
        %p238 = pneg %p103
        %p239 = pneg %p132
        %p240 = pneg %p129
        %s241 = sand.u32 %s119, 1
        %s242 = scalar_lea.sflag [#allocation4], %s241
        %s243 = sand.u32 %s119, 1
        %s244 = smul.addr %s243, 8
        %s245 = scalar_lea.vmem [#allocation8], %s244
        %s246 = smul.u32 2, %s22
        %v247 = vld [vmem:[%s213] sm:$0xf]
        %v248 = vld [vmem:[%s213 + $0x4] sm:$0xf]
        %v249 = vld [vmem:[%s213 + $0x8] sm:$0xf]
        %v250 = vld [vmem:[%s213 + $0xc] sm:$0xf]
        %v253 = vcombine.low %v247, %v249
        %vm255 = vcmask 523264
        %v256 = vsel %vm255, %v253, 0.0
        %257 = vadd.xlane.f32.xlu0 %v256
        %v258 = vpop.xlane.xlu0 %257
        %v261 = vcombine.low %v248, %v250
        %v263 = vsel %vm255, %v261, 0.0
        %264 = vadd.xlane.f32.xlu0 %v263
        %v265 = vpop.xlane.xlu0 %264
        %v266 = vadd.f32 %v258, %v265
        %v267 = vmul.f32 %v247, %v247
        %v268 = vmul.f32 %v249, %v249
        %v271 = vcombine.low %v267, %v268
        %v273 = vsel %vm255, %v271, 0.0
        %274 = vadd.xlane.f32.xlu0 %v273
        %v275 = vpop.xlane.xlu0 %274
        %v276 = vmul.f32 %v248, %v248
        %v277 = vmul.f32 %v250, %v250
        %v280 = vcombine.low %v276, %v277
        %v282 = vsel %vm255, %v280, 0.0
        %283 = vadd.xlane.f32.xlu0 %v282
        %v284 = vpop.xlane.xlu0 %283
        %v285 = vadd.f32 %v275, %v284
        %v286 = vmul.f32 %v266, 0.0078125
        %v287 = vmul.f32 %v285, 0.0078125
        %v288 = vmul.f32 %v286, %v286
        %v289 = vsub.f32 %v287, %v288
        %v290 = vmax.f32 %v289, 0.0
        %v291 = vadd.f32 %v290, 1e-05
        %v292 = vrsqrt.pop %v291
        %v293 = vld [vmem:[#allocation5] sm:$0xff]
        %v294 = vld [vmem:[#allocation5 + $0x8] sm:$0xff]
        %v295 = vld [vmem:[#allocation5 + $0x10] sm:$0xff]
        %v296 = vld [vmem:[#allocation5 + $0x18] sm:$0xff]
        %v297 = vld [vmem:[#allocation5 + $0x20] sm:$0xff]
        %v298 = vld [vmem:[#allocation5 + $0x28] sm:$0xff]
        %v299 = vld [vmem:[#allocation5 + $0x30] sm:$0xff]
        %v300 = vld [vmem:[#allocation5 + $0x38] sm:$0xff]
        %v301 = vld [vmem:[#allocation7] sm:$0xff]
        %v302 = vld [vmem:[#allocation7 + $0x8] sm:$0xff]
        %v303 = vld [vmem:[#allocation7 + $0x10] sm:$0xff]
        %v304 = vld [vmem:[#allocation7 + $0x18] sm:$0xff]
        %v305 = vld [vmem:[#allocation7 + $0x20] sm:$0xff]
        %v306 = vld [vmem:[#allocation7 + $0x28] sm:$0xff]
        %v307 = vld [vmem:[#allocation7 + $0x30] sm:$0xff]
        %v308 = vld [vmem:[#allocation7 + $0x38] sm:$0xff]
        %v311 = vunpack.c.l.s4 839922192
        %v312 = vunpack.c.0.s8 %v311
        %v313 = vlaneseq
        %v314 = vshrl.u32 %v313, 7
        %v315 = vsub.s32 %v312, %v314
        %v316 = vrot.slane %v286, %v315
        %v318 = vunpack.c.l.s4 1985246804
        %v319 = vunpack.c.0.s8 %v318
        %v320 = vlaneseq
        %v321 = vshrl.u32 %v320, 7
        %v322 = vsub.s32 %v319, %v321
        %v323 = vrot.slane %v286, %v322
        %v326 = vsub.f32 %v247, %v316
        %v327 = vsub.f32 %v249, %v323
        %v330 = vunpack.c.l.s4 839922192
        %v331 = vunpack.c.0.s8 %v330
        %v332 = vlaneseq
        %v333 = vshrl.u32 %v332, 7
        %v334 = vsub.s32 %v331, %v333
        %v335 = vrot.slane %v292, %v334
        %v337 = vunpack.c.l.s4 1985246804
        %v338 = vunpack.c.0.s8 %v337
        %v339 = vlaneseq
        %v340 = vshrl.u32 %v339, 7
        %v341 = vsub.s32 %v338, %v340
        %v342 = vrot.slane %v292, %v341
        %v345 = vmul.f32 %v326, %v335
        %v346 = vmul.f32 %v327, %v342
        %v347 = vsub.f32 %v248, %v316
        %v348 = vsub.f32 %v250, %v323
        %v349 = vmul.f32 %v347, %v335
        %v350 = vmul.f32 %v348, %v342
        %v353 = vcombine.low %v349, %v350
        %v354 = vsel %vm255, %v353, 0
        %356 = vmatprep.subr.mxu0 0.0
        %357 = vmatpush1.msra.mxu0 %v301
        %358 = vmatprep.subr.mxu0 0.0
        %359 = vmatpush1.msra.mxu0 %v302
        %360 = vmatprep.subr.mxu0 0.0
        %361 = vmatpush1.msra.mxu0 %v303
        %362 = vmatprep.subr.mxu0 0.0
        %363 = vmatpush1.msra.mxu0 %v304
        %364 = vmatprep.subr.mxu0 0.0
        %365 = vmatpush1.msra.mxu0 %v305
        %366 = vmatprep.subr.mxu0 0.0
        %367 = vmatpush1.msra.mxu0 %v306
        %368 = vmatprep.subr.mxu0 0.0
        %369 = vmatpush1.msra.mxu0 %v307
        %370 = vmatprep.subr.mxu0 0.0
        %371 = vmatpush1.msra.mxu0 %v308
        %372 = vmatprep.subr.mxu0 0.0
        %373 = vmatpush1.msra.mxu0 0.0
        %374 = vmatprep.subr.mxu0 0.0
        %375 = vmatpush1.msra.mxu0 0.0
        %376 = vmatprep.subr.mxu0 0.0
        %377 = vmatpush1.msra.mxu0 0.0
        %378 = vmatprep.subr.mxu0 0.0
        %379 = vmatpush1.msra.mxu0 0.0
        %380 = vmatprep.subr.mxu0 0.0
        %381 = vmatpush1.msra.mxu0 0.0
        %382 = vmatprep.subr.mxu0 0.0
        %383 = vmatpush1.msra.mxu0 0.0
        %384 = vmatprep.subr.mxu0 0.0
        %385 = vmatpush1.msra.mxu0 0.0
        %386 = vmatprep.subr.mxu0 0.0
        %387 = vmatpush1.msra.mxu0 0.0
        %388 = vmatprep.subr.mxu0 0.0
        %389 = vmatpush1.msra.mxu0 0.0
        %390 = vmatprep.subr.mxu0 0.0
        %391 = vmatpush1.msra.mxu0 0.0
        %392 = vmatprep.subr.mxu0 0.0
        %393 = vmatpush1.msra.mxu0 0.0
        %394 = vmatprep.subr.mxu0 0.0
        %395 = vmatpush1.msra.mxu0 0.0
        %396 = vmatprep.subr.mxu0 0.0
        %397 = vmatpush1.msra.mxu0 0.0
        %398 = vmatprep.subr.mxu0 0.0
        %399 = vmatpush1.msra.mxu0 0.0
        %400 = vmatprep.subr.mxu0 0.0
        %401 = vmatpush1.msra.mxu0 0.0
        %402 = vmatprep.subr.mxu0 0.0
        %403 = vmatpush1.msra.mxu0 0.0
        %404 = vmatprep.subr.mxu0 0.0
        %405 = vmatpush1.msra.mxu0 0.0
        %406 = vmatprep.subr.mxu0 0.0
        %407 = vmatpush1.msra.mxu0 0.0
        %408 = vmatprep.subr.mxu0 0.0
        %409 = vmatpush1.msra.mxu0 0.0
        %410 = vmatprep.subr.mxu0 0.0
        %411 = vmatpush1.msra.mxu0 0.0
        %412 = vmatprep.subr.mxu0 0.0
        %413 = vmatpush1.msra.mxu0 0.0
        %414 = vmatprep.subr.mxu0 0.0
        %415 = vmatpush1.msra.mxu0 0.0
        %416 = vmatprep.subr.mxu0 0.0
        %417 = vmatpush1.msra.mxu0 0.0
        %418 = vmatprep.subr.mxu0 0.0
        %419 = vmatpush1.msra.mxu0 0.0
        %420 = vmatprep.mubr.f32.mxu0 0.0
        %421 = vmatmul.mubr.f32.gmra.mrb[0].mxu0 %v354
        %v422 = vpop.f32.mrb[0].mxu0
        %v423 = vadd.f32 0.0, %v422
        %v424 = vpop.f32.mrb[0].mxu0
        %425 = vdwg.mxu0
        %v428 = vcombine.low %v345, %v346
        %v429 = vsel %vm255, %v428, 0
        %431 = vmatprep.subr.mxu0 0.0
        %432 = vmatpush1.msra.mxu0 %v293
        %433 = vmatprep.subr.mxu0 0.0
        %434 = vmatpush1.msra.mxu0 %v294
        %435 = vmatprep.subr.mxu0 0.0
        %436 = vmatpush1.msra.mxu0 %v295
        %437 = vmatprep.subr.mxu0 0.0
        %438 = vmatpush1.msra.mxu0 %v296
        %439 = vmatprep.subr.mxu0 0.0
        %440 = vmatpush1.msra.mxu0 %v297
        %441 = vmatprep.subr.mxu0 0.0
        %442 = vmatpush1.msra.mxu0 %v298
        %443 = vmatprep.subr.mxu0 0.0
        %444 = vmatpush1.msra.mxu0 %v299
        %445 = vmatprep.subr.mxu0 0.0
        %446 = vmatpush1.msra.mxu0 %v300
        %447 = vmatprep.subr.mxu0 0.0
        %448 = vmatpush1.msra.mxu0 0.0
        %449 = vmatprep.subr.mxu0 0.0
        %450 = vmatpush1.msra.mxu0 0.0
        %451 = vmatprep.subr.mxu0 0.0
        %452 = vmatpush1.msra.mxu0 0.0
        %453 = vmatprep.subr.mxu0 0.0
        %454 = vmatpush1.msra.mxu0 0.0
        %455 = vmatprep.subr.mxu0 0.0
        %456 = vmatpush1.msra.mxu0 0.0
        %457 = vmatprep.subr.mxu0 0.0
        %458 = vmatpush1.msra.mxu0 0.0
        %459 = vmatprep.subr.mxu0 0.0
        %460 = vmatpush1.msra.mxu0 0.0
        %461 = vmatprep.subr.mxu0 0.0
        %462 = vmatpush1.msra.mxu0 0.0
        %463 = vmatprep.subr.mxu0 0.0
        %464 = vmatpush1.msra.mxu0 0.0
        %465 = vmatprep.subr.mxu0 0.0
        %466 = vmatpush1.msra.mxu0 0.0
        %467 = vmatprep.subr.mxu0 0.0
        %468 = vmatpush1.msra.mxu0 0.0
        %469 = vmatprep.subr.mxu0 0.0
        %470 = vmatpush1.msra.mxu0 0.0
        %471 = vmatprep.subr.mxu0 0.0
        %472 = vmatpush1.msra.mxu0 0.0
        %473 = vmatprep.subr.mxu0 0.0
        %474 = vmatpush1.msra.mxu0 0.0
        %475 = vmatprep.subr.mxu0 0.0
        %476 = vmatpush1.msra.mxu0 0.0
        %477 = vmatprep.subr.mxu0 0.0
        %478 = vmatpush1.msra.mxu0 0.0
        %479 = vmatprep.subr.mxu0 0.0
        %480 = vmatpush1.msra.mxu0 0.0
        %481 = vmatprep.subr.mxu0 0.0
        %482 = vmatpush1.msra.mxu0 0.0
        %483 = vmatprep.subr.mxu0 0.0
        %484 = vmatpush1.msra.mxu0 0.0
        %485 = vmatprep.subr.mxu0 0.0
        %486 = vmatpush1.msra.mxu0 0.0
        %487 = vmatprep.subr.mxu0 0.0
        %488 = vmatpush1.msra.mxu0 0.0
        %489 = vmatprep.subr.mxu0 0.0
        %490 = vmatpush1.msra.mxu0 0.0
        %491 = vmatprep.subr.mxu0 0.0
        %492 = vmatpush1.msra.mxu0 0.0
        %493 = vmatprep.subr.mxu0 0.0
        %494 = vmatpush1.msra.mxu0 0.0
        %495 = vmatprep.mubr.f32.mxu0 0.0
        %496 = vmatmul.mubr.f32.gmra.mrb[0].mxu0 %v429
        %v497 = vpop.f32.mrb[0].mxu0
        %v498 = vadd.f32 %v423, %v497
        %v499 = vpop.f32.mrb[0].mxu0
        %500 = vdwg.mxu0
        %v501 = vld [vmem:[%s3] sm:$0x1]
        %v503 = vlaneseq
        %v504 = vshrl.u32 %v503, 7
        %v505 = vsub.s32 0, %v504
        %v506 = vrot.slane %v501, %v505
        %v508 = vadd.f32 %v498, %v506
        %509 = vst.msk [vmem:[%s245] sm:$0xff] %vm255, %v508
        %s510 = sand.u32 %s119, 1
        %s511 = scalar_lea.sflag [#allocation4], %s510
        %s512 = sand.u32 %s119, 1
        %s513 = smul.addr %s512, 8
        %s514 = scalar_lea.vmem [#allocation8], %s513
        // Predicated region
        $region49: #{tpu_custom_call.1} parent=35 // pred_check
          %p515 = pneg %p129
        $region50: #{tpu_custom_call.1} parent=35 // pred_check_branch
          %517 = sbr.rel (%p515) target = $region52
        $region51: #{tpu_custom_call.1} parent=35 // pred_region
          %s519 = ssub.s32 128, 128
          %520 = vsyncadd %s511, %s519
          %s521 = smul.addr %s22, 128
          %s522 = scalar_lea.hbm %s4, %s521
          %s524 = sshll.u32 %s514, 4
          %s525 = int_to_ptr.vmem [resolvable:$true] %s524
          %527 = dma.vmem_to_hbm [thread:$0]  %s525, 128, %s522, %s511
        $region52: #{tpu_custom_call.1} parent=35 // pred_fallthru
          _
      $region36: #{tpu_custom_call.1} parent=5 // pred_fallthru
        _
      %p528 = scmp.le.s32.totalorder 2, %s17
      // Predicated region
      $region53: #{tpu_custom_call.1} parent=5 // pred_check
        %p529 = pneg %p528
      $region54: #{tpu_custom_call.1} parent=5 // pred_check_branch
        %531 = sbr.rel (%p529) target = $region56
      $region55: #{tpu_custom_call.1} parent=5 // pred_region
        %s532 = ssub.s32 %s17, 2
        // Predicated region
        $region57: #{tpu_custom_call.1} parent=55 // pred_check
          %p533 = pneg %p135
        $region58: #{tpu_custom_call.1} parent=55 // pred_check_branch
          %535 = sbr.rel (%p533) target = $region60
        $region59: #{tpu_custom_call.1} parent=55 // pred_region
          %s536 = sand.u32 %s120, 1
          %s537 = scalar_lea.sflag [#allocation4], %s536
          %s538 = sand.u32 %s120, 1
          %s539 = smul.addr %s538, 8
          %s540 = scalar_lea.vmem [#allocation8], %s539
          %541 = dma.done %s537, 128
        $region60: #{tpu_custom_call.1} parent=55 // pred_fallthru
          _
      $region56: #{tpu_custom_call.1} parent=5 // pred_fallthru
        _
    $region6: #{tpu_custom_call.1} parent=1 // loop_footer
      %s21 = sadd.s32 1, %s17
    $region7: #{tpu_custom_call.1} parent=1 // loop_footer_branch
      %16 = sbr.rel target = $region3
    $region8: #{tpu_custom_call.1} parent=1 // loop_exit
      _
    %542 = vsyncpa [#allocation3], 1
    %s543 = scalar_lea.sflag [#allocation3], 1
    %544 = vsyncpa %s543, 1
    %545 = vsyncpa [#allocation6], 1
    %546 = vsyncpa [#allocation4], 1
    %s547 = scalar_lea.sflag [#allocation4], 1
    %548 = vsyncpa %s547, 1

</llo_original>
